<compile_context>
chip_gen: v7x
topology: tpu7x:2x2x1
jax: 0.10.0
libtpu: 0.0.40
codegen_flags: <defaults>
</compile_context>

<pallas_src>
import functools

import jax
import jax.numpy as jnp
from jax import lax
from jax.experimental import pallas as pl
from jax.experimental.pallas import tpu as pltpu


def _round_up(x: int, m: int) -> int:
    return ((x + m - 1) // m) * m


def _mlp_critic_kernel(x_ref, w1_ref, b1_ref, w2t_ref, b2t_ref, ot_ref):
    # x_ref  : [TB, obs_size]   batch tile (row-major)
    # w1_ref : [obs_size, H]    resident weight ([in, out] layout)
    # b1_ref : [1, H]           resident bias
    # w2t_ref: [n_actions, H]   resident weight (torch-native [out, in] layout)
    # b2t_ref: [n_actions, 1]   resident bias
    # ot_ref : [n_actions, TB]  lane-dense transposed output tile
    h = jnp.dot(x_ref[...], w1_ref[...], preferred_element_type=jnp.float32)
    h = jnp.maximum(h + b1_ref[...], 0.0)                       # bias + ReLU, f32
    # out.T = W2 @ h.T expressed as an 'nt' matmul (contract the last dims of
    # both operands) so no explicit transpose is materialized in VMEM and the
    # final store is lane-dense (batch on the 128-lane axis).
    out_t = lax.dot_general(
        w2t_ref[...], h,
        dimension_numbers=(((1,), (1,)), ((), ())),
        preferred_element_type=jnp.float32)                     # [n_actions, TB]
    ot_ref[...] = (out_t + b2t_ref[...]).astype(ot_ref.dtype)


def mlp_critic_forward(obs, w1, b1, w2, b2, *, block_b: int = 512):
    """relu(obs @ w1 + b1) @ w2 + b2.   obs: [B, obs_size] -> [B, n_actions]."""
    obs = jnp.asarray(obs, jnp.float32)
    B, obs_size = obs.shape
    hidden = w1.shape[1]
    n_actions = w2.shape[1]
    b1 = jnp.reshape(b1, (1, hidden))
    b2 = jnp.reshape(b2, (1, n_actions))

    # --- lane-dense hidden: zero-pad hidden to a multiple of 128 (exact) -----
    h_pad = _round_up(hidden, 128)
    if h_pad != hidden:
        w1 = jnp.pad(w1, ((0, 0), (0, h_pad - hidden)))
        b1 = jnp.pad(b1, ((0, 0), (0, h_pad - hidden)))
        w2 = jnp.pad(w2, ((0, h_pad - hidden), (0, 0)))

    # --- batch tiling: big 128-aligned tiles; pad B up to a tile multiple ----
    # Tiles this size are tiny vs VMEM (double-buffered x + out < 1 MiB even at
    # block_b=4096), so the default scoped-VMEM limit is fine on v5e/v6e/v7x.
    tb = min(_round_up(block_b, 128), _round_up(B, 128))
    b_pad = _round_up(B, tb)
    if b_pad != B:
        obs = jnp.pad(obs, ((0, b_pad - B), (0, 0)))
    grid = (b_pad // tb,)

    w2t = jnp.transpose(w2)                  # [n_actions, h_pad]
    b2t = jnp.reshape(b2, (n_actions, 1))    # [n_actions, 1]

    cost = pl.CostEstimate(
        flops=2 * b_pad * (obs_size * h_pad + h_pad * n_actions),
        transcendentals=0,
        bytes_accessed=4 * (b_pad * obs_size + b_pad * n_actions
                            + obs_size * h_pad + h_pad
                            + n_actions * h_pad + n_actions),
    )

    out_t = pl.pallas_call(
        _mlp_critic_kernel,
        out_shape=jax.ShapeDtypeStruct((n_actions, b_pad), jnp.float32),
        grid=grid,
        in_specs=[
            pl.BlockSpec((tb, obs_size), lambda i: (i, 0)),      # batch-tiled x
            pl.BlockSpec((obs_size, h_pad), lambda i: (0, 0)),   # resident w1
            pl.BlockSpec((1, h_pad), lambda i: (0, 0)),          # resident b1
            pl.BlockSpec((n_actions, h_pad), lambda i: (0, 0)),  # resident w2.T
            pl.BlockSpec((n_actions, 1), lambda i: (0, 0)),      # resident b2.T
        ],
        out_specs=pl.BlockSpec((n_actions, tb), lambda i: (0, i)),
        compiler_params=pltpu.CompilerParams(
            # Independent batch tiles -> shard across both TCs on v7x.
            dimension_semantics=("parallel",),
        ),
        cost_estimate=cost,
    )(obs, w1, b1, w2t, b2t)

    # Undo the layout plumbing: [n_actions, b_pad] -> [B, n_actions].
    return out_t.T[:B]


def init_params(key, obs_size, n_actions, hidden_size=32):
    """Deterministic init mimicking torch.nn.Linear defaults (uniform +/- 1/sqrt(fan_in)).

    Weights are stored as [in, out] (transpose of torch layout); the wrapper
    handles all layout plumbing for the kernel.
    """
    k1, k2, k3, k4 = jax.random.split(key, 4)
    lim1 = 1.0 / jnp.sqrt(obs_size)
    lim2 = 1.0 / jnp.sqrt(hidden_size)
    w1 = jax.random.uniform(k1, (obs_size, hidden_size), jnp.float32, -lim1, lim1)
    b1 = jax.random.uniform(k2, (1, hidden_size), jnp.float32, -lim1, lim1)
    w2 = jax.random.uniform(k3, (hidden_size, n_actions), jnp.float32, -lim2, lim2)
    b2 = jax.random.uniform(k4, (1, n_actions), jnp.float32, -lim2, lim2)
    return w1, b1, w2, b2


if __name__ == "__main__":
    obs_size = 16
    n_actions = 4
    hidden_size = 32
    batch = 300   # deliberately not a tile multiple -> exercises the padding path

    key = jax.random.PRNGKey(0)
    k_obs, k_params = jax.random.split(key)
    obs = jax.random.normal(k_obs, (batch, obs_size), jnp.float32)
    w1, b1, w2, b2 = init_params(k_params, obs_size, n_actions, hidden_size)

    # Small block_b so this small demo exercises a multi-step (pipelined) grid.
    fwd = jax.jit(functools.partial(mlp_critic_forward, block_b=128))
    out = jax.block_until_ready(fwd(obs, w1, b1, w2, b2))

    # Pure-JAX reference check of the forward semantics (unpadded params).
    ref = jnp.maximum(obs @ w1 + b1, 0.0) @ w2 + b2
    assert out.shape == (batch, n_actions)
    assert jnp.allclose(out, ref, atol=1e-5, rtol=1e-5), float(
        jnp.max(jnp.abs(out - ref)))

    print("KERNEL_OK")
</pallas_src>

<mosaic_0001>
module attributes {stable_mosaic.version = 11 : i64} {
  func.func @_mlp_critic_kernel(%arg0: i32, %arg1: memref<128x16xf32, #tpu.memory_space<vmem>>, %arg2: memref<16x128xf32, #tpu.memory_space<vmem>>, %arg3: memref<1x128xf32, #tpu.memory_space<vmem>>, %arg4: memref<4x128xf32, #tpu.memory_space<vmem>>, %arg5: memref<4x1xf32, #tpu.memory_space<vmem>>, %arg6: memref<4x128xf32, #tpu.memory_space<vmem>>) attributes {dimension_semantics = [#tpu.dimension_semantics<parallel>], iteration_bounds = array<i64: 3>, scalar_prefetch = 0 : i64, scratch_operands = 0 : i64, tpu.core_type = #tpu.core_type<tc>, window_params = [{transform_indices = @transform_0, window_bounds = array<i64: 128, 16>}, {pipeline_mode = #tpu.pipeline_mode<synchronous>, transform_indices = @transform_1, window_bounds = array<i64: 16, 128>}, {pipeline_mode = #tpu.pipeline_mode<synchronous>, transform_indices = @transform_2, window_bounds = array<i64: 1, 128>}, {pipeline_mode = #tpu.pipeline_mode<synchronous>, transform_indices = @transform_3, window_bounds = array<i64: 4, 128>}, {pipeline_mode = #tpu.pipeline_mode<synchronous>, transform_indices = @transform_4, window_bounds = array<i64: 4, 1>}, {transform_indices = @transform_5, window_bounds = array<i64: 4, 128>}]} {
    %c0 = arith.constant 0 : index
    %c0_0 = arith.constant 0 : index
    %0 = vector.load %arg1[%c0, %c0_0] : memref<128x16xf32, #tpu.memory_space<vmem>>, vector<128x16xf32>
    %c0_1 = arith.constant 0 : index
    %c0_2 = arith.constant 0 : index
    %1 = vector.load %arg2[%c0_1, %c0_2] : memref<16x128xf32, #tpu.memory_space<vmem>>, vector<16x128xf32>
    %cst = arith.constant dense<0.000000e+00> : vector<128x128xf32>
    %2 = tpu.matmul %0, %1, %cst {dimension_numbers = #tpu.dot_dimension_numbers<[1], [0], [0], [1], [0, 0, 1, 1], [], []>} : vector<128x16xf32>, vector<16x128xf32>, vector<128x128xf32> -> vector<128x128xf32>
    %c0_3 = arith.constant 0 : index
    %c0_4 = arith.constant 0 : index
    %3 = vector.load %arg3[%c0_3, %c0_4] : memref<1x128xf32, #tpu.memory_space<vmem>>, vector<1x128xf32>
    %4 = vector.broadcast %3 : vector<1x128xf32> to vector<128x128xf32>
    %5 = arith.addf %2, %4 : vector<128x128xf32>
    %cst_5 = arith.constant 0.000000e+00 : f32
    %6 = vector.broadcast %cst_5 : f32 to vector<128x128xf32>
    %7 = arith.maximumf %5, %6 : vector<128x128xf32>
    %c0_6 = arith.constant 0 : index
    %c0_7 = arith.constant 0 : index
    %8 = vector.load %arg4[%c0_6, %c0_7] : memref<4x128xf32, #tpu.memory_space<vmem>>, vector<4x128xf32>
    %cst_8 = arith.constant dense<0.000000e+00> : vector<4x128xf32>
    %9 = tpu.matmul %8, %7, %cst_8 {dimension_numbers = #tpu.dot_dimension_numbers<[1], [1], [0], [0], [0, 0, 1, 0], [], []>} : vector<4x128xf32>, vector<128x128xf32>, vector<4x128xf32> -> vector<4x128xf32>
    %c0_9 = arith.constant 0 : index
    %c0_10 = arith.constant 0 : index
    %10 = vector.load %arg5[%c0_9, %c0_10] : memref<4x1xf32, #tpu.memory_space<vmem>>, vector<4x1xf32>
    %11 = vector.broadcast %10 : vector<4x1xf32> to vector<4x128xf32>
    %12 = arith.addf %9, %11 : vector<4x128xf32>
    %c0_11 = arith.constant 0 : index
    %c0_12 = arith.constant 0 : index
    %13 = vector.load %arg6[%c0_11, %c0_12] : memref<4x128xf32, #tpu.memory_space<vmem>>, vector<4x128xf32>
    tpu.vector_store %arg6[%c0_11, %c0_12], %12 {strides = array<i32>} : memref<4x128xf32, #tpu.memory_space<vmem>>, vector<4x128xf32>,
    return
  }
  func.func @transform_0(%arg0: i32) -> (i32, i32) {
    %c0_i32 = arith.constant 0 : i32
    %c0_i32_0 = arith.constant 0 : i32
    return %arg0, %c0_i32 : i32, i32
  }
  func.func @transform_1(%arg0: i32) -> (i32, i32) {
    %c0_i32 = arith.constant 0 : i32
    %c0_i32_0 = arith.constant 0 : i32
    %c0_i32_1 = arith.constant 0 : i32
    return %c0_i32, %c0_i32_0 : i32, i32
  }
  func.func @transform_2(%arg0: i32) -> (i32, i32) {
    %c0_i32 = arith.constant 0 : i32
    %c0_i32_0 = arith.constant 0 : i32
    %c0_i32_1 = arith.constant 0 : i32
    return %c0_i32, %c0_i32_0 : i32, i32
  }
  func.func @transform_3(%arg0: i32) -> (i32, i32) {
    %c0_i32 = arith.constant 0 : i32
    %c0_i32_0 = arith.constant 0 : i32
    %c0_i32_1 = arith.constant 0 : i32
    return %c0_i32, %c0_i32_0 : i32, i32
  }
  func.func @transform_4(%arg0: i32) -> (i32, i32) {
    %c0_i32 = arith.constant 0 : i32
    %c0_i32_0 = arith.constant 0 : i32
    %c0_i32_1 = arith.constant 0 : i32
    return %c0_i32, %c0_i32_0 : i32, i32
  }
  func.func @transform_5(%arg0: i32) -> (i32, i32) {
    %c0_i32 = arith.constant 0 : i32
    %c0_i32_0 = arith.constant 0 : i32
    return %c0_i32, %arg0 : i32, i32
  }
}

</mosaic_0001>

<llo_original>
// kernel: mlp_critic_forward.1
$region0: #{mlp_critic_forward.1}
  #allocation0 [shape = 'u32[]', space=smem, size = 0x4, offset = 0x4, fixed_abs, tag = 'smem constant byte address 0x4 - core index']
  #allocation1 [shape = 'u32[144,128]{1,0:T(1,128)}', space=vmem, size = 0x12000, scoped, tag = 'internal scratch']
  %s0 = inlined_call_operand.vmem [shape: f32[384,16], index: 0, kind: input, shape index: {}]
  %s1 = inlined_call_operand.vmem [shape: f32[16,128], index: 1, kind: input, shape index: {}]
  %s2 = inlined_call_operand.vmem [shape: f32[1,128], index: 2, kind: input, shape index: {}]
  %s3 = inlined_call_operand.vmem [shape: f32[4,128], index: 3, kind: input, shape index: {}]
  %s4 = inlined_call_operand.vmem [shape: f32[4,1], index: 4, kind: input, shape index: {}]
  %s5 = inlined_call_operand.hbm [shape: f32[4,384], index: 5, kind: output, shape index: {}]
  %s6 = sld [smem:[#allocation0]]
  $region53: #{mlp_critic_forward.1} parent=0
    _
  %s8 = ssub.s32 1, %s6
  %s9 = scalar_select 0, %s8, %s6
  $region1: #{mlp_critic_forward.1} parent=0
    #allocation2 [shape = 'u8[4096]{0}', space=vmem, size = 0x1000, scoped, tag = 'output window, operand 0']
    #allocation3 [shape = 's32[2]{0}', space=sflag, size = 0x8, scoped, tag = 'scoped memory for mlp_critic_forward.1']
    %10 = vsyncpa [#allocation3], 0
    %s11 = scalar_lea.sflag [#allocation3], 1
    %12 = vsyncpa %s11, 0
    loop: start=0, step=1, limit=5
    $region2: #{mlp_critic_forward.1} parent=1 // loop_pre_header
      _
    $region3: #{mlp_critic_forward.1} parent=1 // loop_header
      %s14 = sphi 0, %s18
      %p15 = scmp.ge.s32.totalorder %s14, 5
      %s24 = sphi 0, %s26
      %s27 = sphi 0, %s24
      %s28 = sphi 0, %s27
      %s44 = sphi 0, %s28
      %s48 = sphi 0, %s48
      %s50 = sphi 0, %s48
      %s51 = sphi 0, %s50
      %s65 = sphi 0, %s51
      %s69 = sphi 0, %s69
      %s71 = sphi 0, %s69
      %s72 = sphi 0, %s71
      %s86 = sphi 0, %s72
      %s90 = sphi 0, %s90
      %s92 = sphi 0, %s90
      %s93 = sphi 0, %s92
      %s107 = sphi 0, %s93
      %s111 = sphi 0, %s111
      %s113 = sphi 0, %s111
      %s114 = sphi 0, %s113
      %s128 = sphi 0, %s114
      %s134 = sphi 0, %s136
      %s137 = sphi 0, %s134
      %s138 = sphi 0, %s137
      %s154 = sphi 0, %s138
    $region4: #{mlp_critic_forward.1} parent=1 // loop_header_branch
      %17 = sbr.rel (%p15) target = $region8
    $region5: #{mlp_critic_forward.1} parent=1 // loop_body
      %s19 = ssub.s32 %s14, 1
      %s20 = ssub.s32 %s14, 2
      %s21 = sadd.s32 %s14, 1
      %s22 = ssub.s32 %s14, %s21
      %p23 = scmp.eq.s32.totalorder %s22, 0
      %s25 = sadd.s32 %s24, 1
      %s26 = scalar_select %p23, %s24, %s25
      %p29 = pneg %p23
      %p30 = scmp.eq.s32.totalorder %s14, 2
      %p31 = por %p29, %p30
      %p32 = scmp.ne.s32.totalorder %s24, %s27
      %p33 = scmp.eq.s32.totalorder %s14, 0
      %p34 = por %p32, %p33
      %p35 = scmp.ne.s32.totalorder %s24, %s27
      %p36 = scmp.eq.s32.totalorder %s19, 2
      %p37 = por %p35, %p36
      %p38 = scmp.ne.s32.totalorder %s27, %s28
      %p39 = scmp.eq.s32.totalorder %s19, 0
      %p40 = por %p38, %p39
      %p41 = scmp.ne.s32.totalorder %s27, %s28
      %p42 = scmp.eq.s32.totalorder %s20, 2
      %p43 = por %p41, %p42
      %p45 = scmp.ne.s32.totalorder %s28, %s44
      %p46 = scmp.eq.s32.totalorder %s20, 0
      %p47 = por %p45, %p46
      %s49 = sadd.s32 %s48, 1
      %p52 = scmp.eq.s32.totalorder %s14, 2
      %p53 = scmp.ne.s32.totalorder %s48, %s50
      %p54 = scmp.eq.s32.totalorder %s14, 0
      %p55 = por %p53, %p54
      %p56 = scmp.ne.s32.totalorder %s48, %s50
      %p57 = scmp.eq.s32.totalorder %s19, 2
      %p58 = por %p56, %p57
      %p59 = scmp.ne.s32.totalorder %s50, %s51
      %p60 = scmp.eq.s32.totalorder %s19, 0
      %p61 = por %p59, %p60
      %p62 = scmp.ne.s32.totalorder %s50, %s51
      %p63 = scmp.eq.s32.totalorder %s20, 2
      %p64 = por %p62, %p63
      %p66 = scmp.ne.s32.totalorder %s51, %s65
      %p67 = scmp.eq.s32.totalorder %s20, 0
      %p68 = por %p66, %p67
      %s70 = sadd.s32 %s69, 1
      %p73 = scmp.eq.s32.totalorder %s14, 2
      %p74 = scmp.ne.s32.totalorder %s69, %s71
      %p75 = scmp.eq.s32.totalorder %s14, 0
      %p76 = por %p74, %p75
      %p77 = scmp.ne.s32.totalorder %s69, %s71
      %p78 = scmp.eq.s32.totalorder %s19, 2
      %p79 = por %p77, %p78
      %p80 = scmp.ne.s32.totalorder %s71, %s72
      %p81 = scmp.eq.s32.totalorder %s19, 0
      %p82 = por %p80, %p81
      %p83 = scmp.ne.s32.totalorder %s71, %s72
      %p84 = scmp.eq.s32.totalorder %s20, 2
      %p85 = por %p83, %p84
      %p87 = scmp.ne.s32.totalorder %s72, %s86
      %p88 = scmp.eq.s32.totalorder %s20, 0
      %p89 = por %p87, %p88
      %s91 = sadd.s32 %s90, 1
      %p94 = scmp.eq.s32.totalorder %s14, 2
      %p95 = scmp.ne.s32.totalorder %s90, %s92
      %p96 = scmp.eq.s32.totalorder %s14, 0
      %p97 = por %p95, %p96
      %p98 = scmp.ne.s32.totalorder %s90, %s92
      %p99 = scmp.eq.s32.totalorder %s19, 2
      %p100 = por %p98, %p99
      %p101 = scmp.ne.s32.totalorder %s92, %s93
      %p102 = scmp.eq.s32.totalorder %s19, 0
      %p103 = por %p101, %p102
      %p104 = scmp.ne.s32.totalorder %s92, %s93
      %p105 = scmp.eq.s32.totalorder %s20, 2
      %p106 = por %p104, %p105
      %p108 = scmp.ne.s32.totalorder %s93, %s107
      %p109 = scmp.eq.s32.totalorder %s20, 0
      %p110 = por %p108, %p109
      %s112 = sadd.s32 %s111, 1
      %p115 = scmp.eq.s32.totalorder %s14, 2
      %p116 = scmp.ne.s32.totalorder %s111, %s113
      %p117 = scmp.eq.s32.totalorder %s14, 0
      %p118 = por %p116, %p117
      %p119 = scmp.ne.s32.totalorder %s111, %s113
      %p120 = scmp.eq.s32.totalorder %s19, 2
      %p121 = por %p119, %p120
      %p122 = scmp.ne.s32.totalorder %s113, %s114
      %p123 = scmp.eq.s32.totalorder %s19, 0
      %p124 = por %p122, %p123
      %p125 = scmp.ne.s32.totalorder %s113, %s114
      %p126 = scmp.eq.s32.totalorder %s20, 2
      %p127 = por %p125, %p126
      %p129 = scmp.ne.s32.totalorder %s114, %s128
      %p130 = scmp.eq.s32.totalorder %s20, 0
      %p131 = por %p129, %p130
      %s132 = ssub.s32 %s14, %s21
      %p133 = scmp.eq.s32.totalorder %s132, 0
      %s135 = sadd.s32 %s134, 1
      %s136 = scalar_select %p133, %s134, %s135
      %p139 = pneg %p133
      %p140 = scmp.eq.s32.totalorder %s14, 2
      %p141 = por %p139, %p140
      %p142 = scmp.ne.s32.totalorder %s134, %s137
      %p143 = scmp.eq.s32.totalorder %s14, 0
      %p144 = por %p142, %p143
      %p145 = scmp.ne.s32.totalorder %s134, %s137
      %p146 = scmp.eq.s32.totalorder %s19, 2
      %p147 = por %p145, %p146
      %p148 = scmp.ne.s32.totalorder %s137, %s138
      %p149 = scmp.eq.s32.totalorder %s19, 0
      %p150 = por %p148, %p149
      %p151 = scmp.ne.s32.totalorder %s137, %s138
      %p152 = scmp.eq.s32.totalorder %s20, 2
      %p153 = por %p151, %p152
      %p155 = scmp.ne.s32.totalorder %s138, %s154
      %p156 = scmp.eq.s32.totalorder %s20, 0
      %p157 = por %p155, %p156
      %p158 = scmp.le.s32.totalorder 1, %s14
      %p159 = scmp.lt.s32.totalorder %s14, 4
      %p160 = pnand %p158, %p159
      %p161 = pneg %p160
      // Predicated region
      $region9: #{mlp_critic_forward.1} parent=5 // pred_check
        _
      $region10: #{mlp_critic_forward.1} parent=5 // pred_check_branch
        %163 = sbr.rel (%p160) target = $region12
      $region11: #{mlp_critic_forward.1} parent=5 // pred_region
        %s164 = ssub.s32 %s14, 1
        // Predicated region
        $region13: #{mlp_critic_forward.1} parent=11 // pred_check
          %p165 = pneg %p61
        $region14: #{mlp_critic_forward.1} parent=11 // pred_check_branch
          %167 = sbr.rel (%p165) target = $region16
        $region15: #{mlp_critic_forward.1} parent=11 // pred_region
          _
        $region16: #{mlp_critic_forward.1} parent=11 // pred_fallthru
          _
        // Predicated region
        $region17: #{mlp_critic_forward.1} parent=11 // pred_check
          %p168 = pneg %p82
        $region18: #{mlp_critic_forward.1} parent=11 // pred_check_branch
          %170 = sbr.rel (%p168) target = $region20
        $region19: #{mlp_critic_forward.1} parent=11 // pred_region
          _
        $region20: #{mlp_critic_forward.1} parent=11 // pred_fallthru
          _
        // Predicated region
        $region21: #{mlp_critic_forward.1} parent=11 // pred_check
          %p171 = pneg %p103
        $region22: #{mlp_critic_forward.1} parent=11 // pred_check_branch
          %173 = sbr.rel (%p171) target = $region24
        $region23: #{mlp_critic_forward.1} parent=11 // pred_region
          _
        $region24: #{mlp_critic_forward.1} parent=11 // pred_fallthru
          _
        // Predicated region
        $region25: #{mlp_critic_forward.1} parent=11 // pred_check
          %p174 = pneg %p124
        $region26: #{mlp_critic_forward.1} parent=11 // pred_check_branch
          %176 = sbr.rel (%p174) target = $region28
        $region27: #{mlp_critic_forward.1} parent=11 // pred_region
          _
        $region28: #{mlp_critic_forward.1} parent=11 // pred_fallthru
          _
      $region12: #{mlp_critic_forward.1} parent=5 // pred_fallthru
        _
      %p177 = scmp.lt.s32.totalorder %s14, 3
      // Predicated region
      $region29: #{mlp_critic_forward.1} parent=5 // pred_check
        %p178 = pneg %p177
      $region30: #{mlp_critic_forward.1} parent=5 // pred_check_branch
        %180 = sbr.rel (%p178) target = $region32
      $region31: #{mlp_critic_forward.1} parent=5 // pred_region
        // Predicated region
        $region33: #{mlp_critic_forward.1} parent=31 // pred_check
          %p181 = pneg %p34
        $region34: #{mlp_critic_forward.1} parent=31 // pred_check_branch
          %183 = sbr.rel (%p181) target = $region36
        $region35: #{mlp_critic_forward.1} parent=31 // pred_region
          %s184 = smul.u32 16, %s14
          %p185 = scmp.lt.s32.totalorder %s184, 47
          %s186 = scalar_select %p185, %s184, 47
          %s187 = smul.addr %s186, 8
          %s188 = scalar_lea.vmem %s0, %s187
          %s189 = smul.u32 16, %s14
        $region36: #{mlp_critic_forward.1} parent=31 // pred_fallthru
          _
      $region32: #{mlp_critic_forward.1} parent=5 // pred_fallthru
        _
      %p190 = scmp.le.s32.totalorder 1, %s14
      %p191 = scmp.lt.s32.totalorder %s14, 4
      %p192 = pnand %p190, %p191
      %p193 = pneg %p192
      // Predicated region
      $region37: #{mlp_critic_forward.1} parent=5 // pred_check
        _
      $region38: #{mlp_critic_forward.1} parent=5 // pred_check_branch
        %195 = sbr.rel (%p192) target = $region40
      $region39: #{mlp_critic_forward.1} parent=5 // pred_region
        %s196 = ssub.s32 %s14, 1
        %s197 = smul.u32 16, %s19
        %p198 = scmp.lt.s32.totalorder %s197, 47
        %s199 = scalar_select %p198, %s197, 47
        %s200 = smul.addr %s199, 8
        %s201 = scalar_lea.vmem %s0, %s200
        %p202 = pneg %p40
        %p203 = pneg %p37
        %p204 = pneg %p61
        %p205 = pneg %p58
        %p206 = pneg %p82
        %p207 = pneg %p79
        %p208 = pneg %p103
        %p209 = pneg %p100
        %p210 = pneg %p124
        %p211 = pneg %p121
        %p212 = pneg %p150
        %p213 = pneg %p147
        %s214 = sand.u32 %s137, 1
        %s215 = scalar_lea.sflag [#allocation3], %s214
        %s216 = sand.u32 %s137, 1
        %s217 = smul.addr %s216, 4
        %s218 = scalar_lea.vmem [#allocation2], %s217
        %s219 = smul.u32 16, %s19
        %p220 = scmp.lt.s32.totalorder %s219, 47
        %s221 = scalar_select %p220, %s219, 47
        %s222 = smul.addr %s221, 8
        %s223 = scalar_lea.vmem %s0, %s222
        %s224 = smul.u32 16, %s19
        %v225 = vld [vmem:[%s223] sm:$0xff]
        %v226 = vld [vmem:[%s223 + $0x8] sm:$0xff]
        %v227 = vld [vmem:[%s223 + $0x10] sm:$0xff]
        %v228 = vld [vmem:[%s223 + $0x18] sm:$0xff]
        %v229 = vld [vmem:[%s223 + $0x20] sm:$0xff]
        %v230 = vld [vmem:[%s223 + $0x28] sm:$0xff]
        %v231 = vld [vmem:[%s223 + $0x30] sm:$0xff]
        %v232 = vld [vmem:[%s223 + $0x38] sm:$0xff]
        %v233 = vld [vmem:[%s223 + $0x40] sm:$0xff]
        %v234 = vld [vmem:[%s223 + $0x48] sm:$0xff]
        %v235 = vld [vmem:[%s223 + $0x50] sm:$0xff]
        %v236 = vld [vmem:[%s223 + $0x58] sm:$0xff]
        %v237 = vld [vmem:[%s223 + $0x60] sm:$0xff]
        %v238 = vld [vmem:[%s223 + $0x68] sm:$0xff]
        %v239 = vld [vmem:[%s223 + $0x70] sm:$0xff]
        %v240 = vld [vmem:[%s223 + $0x78] sm:$0xff]
        %v241 = vld [vmem:[%s1] sm:$0xff]
        %v242 = vld [vmem:[%s1 + $0x8] sm:$0xff]
        %v243 = vld [vmem:[%s2] sm:$0x1]
        %v245 = vlaneseq
        %v246 = vshrl.u32 %v245, 7
        %v247 = vsub.s32 0, %v246
        %v248 = vrot.slane %v243, %v247
        %vm250 = vcmask 130048
        %v252 = vsel %vm250, %v225, 0
        %v255 = vsel %vm250, %v226, 0
        %v258 = vsel %vm250, %v227, 0
        %v261 = vsel %vm250, %v228, 0
        %v264 = vsel %vm250, %v229, 0
        %v267 = vsel %vm250, %v230, 0
        %v270 = vsel %vm250, %v231, 0
        %v273 = vsel %vm250, %v232, 0
        %v276 = vsel %vm250, %v233, 0
        %v279 = vsel %vm250, %v234, 0
        %v282 = vsel %vm250, %v235, 0
        %v285 = vsel %vm250, %v236, 0
        %v288 = vsel %vm250, %v237, 0
        %v291 = vsel %vm250, %v238, 0
        %v294 = vsel %vm250, %v239, 0
        %v297 = vsel %vm250, %v240, 0
        %299 = vmatprep.subr.mxu0 0.0
        %300 = vmatpush1.msra.mxu0 %v241
        %301 = vmatprep.subr.mxu0 0.0
        %302 = vmatpush1.msra.mxu0 %v242
        %303 = vmatprep.subr.mxu0 0.0
        %304 = vmatpush1.msra.mxu0 0.0
        %305 = vmatprep.subr.mxu0 0.0
        %306 = vmatpush1.msra.mxu0 0.0
        %307 = vmatprep.subr.mxu0 0.0
        %308 = vmatpush1.msra.mxu0 0.0
        %309 = vmatprep.subr.mxu0 0.0
        %310 = vmatpush1.msra.mxu0 0.0
        %311 = vmatprep.subr.mxu0 0.0
        %312 = vmatpush1.msra.mxu0 0.0
        %313 = vmatprep.subr.mxu0 0.0
        %314 = vmatpush1.msra.mxu0 0.0
        %315 = vmatprep.subr.mxu0 0.0
        %316 = vmatpush1.msra.mxu0 0.0
        %317 = vmatprep.subr.mxu0 0.0
        %318 = vmatpush1.msra.mxu0 0.0
        %319 = vmatprep.subr.mxu0 0.0
        %320 = vmatpush1.msra.mxu0 0.0
        %321 = vmatprep.subr.mxu0 0.0
        %322 = vmatpush1.msra.mxu0 0.0
        %323 = vmatprep.subr.mxu0 0.0
        %324 = vmatpush1.msra.mxu0 0.0
        %325 = vmatprep.subr.mxu0 0.0
        %326 = vmatpush1.msra.mxu0 0.0
        %327 = vmatprep.subr.mxu0 0.0
        %328 = vmatpush1.msra.mxu0 0.0
        %329 = vmatprep.subr.mxu0 0.0
        %330 = vmatpush1.msra.mxu0 0.0
        %331 = vmatprep.subr.mxu0 0.0
        %332 = vmatpush1.msra.mxu0 0.0
        %333 = vmatprep.subr.mxu0 0.0
        %334 = vmatpush1.msra.mxu0 0.0
        %335 = vmatprep.subr.mxu0 0.0
        %336 = vmatpush1.msra.mxu0 0.0
        %337 = vmatprep.subr.mxu0 0.0
        %338 = vmatpush1.msra.mxu0 0.0
        %339 = vmatprep.subr.mxu0 0.0
        %340 = vmatpush1.msra.mxu0 0.0
        %341 = vmatprep.subr.mxu0 0.0
        %342 = vmatpush1.msra.mxu0 0.0
        %343 = vmatprep.subr.mxu0 0.0
        %344 = vmatpush1.msra.mxu0 0.0
        %345 = vmatprep.subr.mxu0 0.0
        %346 = vmatpush1.msra.mxu0 0.0
        %347 = vmatprep.subr.mxu0 0.0
        %348 = vmatpush1.msra.mxu0 0.0
        %349 = vmatprep.subr.mxu0 0.0
        %350 = vmatpush1.msra.mxu0 0.0
        %351 = vmatprep.subr.mxu0 0.0
        %352 = vmatpush1.msra.mxu0 0.0
        %353 = vmatprep.subr.mxu0 0.0
        %354 = vmatpush1.msra.mxu0 0.0
        %355 = vmatprep.subr.mxu0 0.0
        %356 = vmatpush1.msra.mxu0 0.0
        %357 = vmatprep.subr.mxu0 0.0
        %358 = vmatpush1.msra.mxu0 0.0
        %359 = vmatprep.subr.mxu0 0.0
        %360 = vmatpush1.msra.mxu0 0.0
        %361 = vmatprep.subr.mxu0 0.0
        %362 = vmatpush1.msra.mxu0 0.0
        %363 = vmatprep.mubr.f32.mxu0 0.0
        %364 = vmatmul.mubr.f32.gmra.mrb[0].mxu0 %v252
        %v365 = vpop.f32.mrb[0].mxu0
        %v366 = vadd.f32 %v248, %v365
        %v367 = vpop.f32.mrb[0].mxu0
        %368 = vmatprep.mubr.f32.mxu0 0.0
        %369 = vmatmul.mubr.f32.gmra.mrb[0].mxu0 %v255
        %v370 = vpop.f32.mrb[0].mxu0
        %v371 = vadd.f32 %v248, %v370
        %v372 = vpop.f32.mrb[0].mxu0
        %373 = vmatprep.mubr.f32.mxu0 0.0
        %374 = vmatmul.mubr.f32.gmra.mrb[0].mxu0 %v258
        %v375 = vpop.f32.mrb[0].mxu0
        %v376 = vadd.f32 %v248, %v375
        %v377 = vpop.f32.mrb[0].mxu0
        %378 = vmatprep.mubr.f32.mxu0 0.0
        %379 = vmatmul.mubr.f32.gmra.mrb[0].mxu0 %v261
        %v380 = vpop.f32.mrb[0].mxu0
        %v381 = vadd.f32 %v248, %v380
        %v382 = vpop.f32.mrb[0].mxu0
        %383 = vmatprep.mubr.f32.mxu0 0.0
        %384 = vmatmul.mubr.f32.gmra.mrb[0].mxu0 %v264
        %v385 = vpop.f32.mrb[0].mxu0
        %v386 = vadd.f32 %v248, %v385
        %v387 = vpop.f32.mrb[0].mxu0
        %388 = vmatprep.mubr.f32.mxu0 0.0
        %389 = vmatmul.mubr.f32.gmra.mrb[0].mxu0 %v267
        %v390 = vpop.f32.mrb[0].mxu0
        %v391 = vadd.f32 %v248, %v390
        %v392 = vpop.f32.mrb[0].mxu0
        %393 = vmatprep.mubr.f32.mxu0 0.0
        %394 = vmatmul.mubr.f32.gmra.mrb[0].mxu0 %v270
        %v395 = vpop.f32.mrb[0].mxu0
        %v396 = vadd.f32 %v248, %v395
        %v397 = vpop.f32.mrb[0].mxu0
        %398 = vmatprep.mubr.f32.mxu0 0.0
        %399 = vmatmul.mubr.f32.gmra.mrb[0].mxu0 %v273
        %v400 = vpop.f32.mrb[0].mxu0
        %v401 = vadd.f32 %v248, %v400
        %v402 = vpop.f32.mrb[0].mxu0
        %403 = vmatprep.mubr.f32.mxu0 0.0
        %404 = vmatmul.mubr.f32.gmra.mrb[0].mxu0 %v276
        %v405 = vpop.f32.mrb[0].mxu0
        %v406 = vadd.f32 %v248, %v405
        %v407 = vpop.f32.mrb[0].mxu0
        %408 = vmatprep.mubr.f32.mxu0 0.0
        %409 = vmatmul.mubr.f32.gmra.mrb[0].mxu0 %v279
        %v410 = vpop.f32.mrb[0].mxu0
        %v411 = vadd.f32 %v248, %v410
        %v412 = vpop.f32.mrb[0].mxu0
        %413 = vmatprep.mubr.f32.mxu0 0.0
        %414 = vmatmul.mubr.f32.gmra.mrb[0].mxu0 %v282
        %v415 = vpop.f32.mrb[0].mxu0
        %v416 = vadd.f32 %v248, %v415
        %v417 = vpop.f32.mrb[0].mxu0
        %418 = vmatprep.mubr.f32.mxu0 0.0
        %419 = vmatmul.mubr.f32.gmra.mrb[0].mxu0 %v285
        %v420 = vpop.f32.mrb[0].mxu0
        %v421 = vadd.f32 %v248, %v420
        %v422 = vpop.f32.mrb[0].mxu0
        %423 = vmatprep.mubr.f32.mxu0 0.0
        %424 = vmatmul.mubr.f32.gmra.mrb[0].mxu0 %v288
        %v425 = vpop.f32.mrb[0].mxu0
        %v426 = vadd.f32 %v248, %v425
        %v427 = vpop.f32.mrb[0].mxu0
        %428 = vmatprep.mubr.f32.mxu0 0.0
        %429 = vmatmul.mubr.f32.gmra.mrb[0].mxu0 %v291
        %v430 = vpop.f32.mrb[0].mxu0
        %v431 = vadd.f32 %v248, %v430
        %v432 = vpop.f32.mrb[0].mxu0
        %433 = vmatprep.mubr.f32.mxu0 0.0
        %434 = vmatmul.mubr.f32.gmra.mrb[0].mxu0 %v294
        %v435 = vpop.f32.mrb[0].mxu0
        %v436 = vadd.f32 %v248, %v435
        %v437 = vpop.f32.mrb[0].mxu0
        %438 = vmatprep.mubr.f32.mxu0 0.0
        %439 = vmatmul.mubr.f32.gmra.mrb[0].mxu0 %v297
        %v440 = vpop.f32.mrb[0].mxu0
        %v441 = vadd.f32 %v248, %v440
        %v442 = vpop.f32.mrb[0].mxu0
        %443 = vdwg.mxu0
        %v444 = vmax.f32 %v366, 0.0
        %v445 = vmax.f32 %v371, 0.0
        %v446 = vmax.f32 %v376, 0.0
        %v447 = vmax.f32 %v381, 0.0
        %v448 = vmax.f32 %v386, 0.0
        %v449 = vmax.f32 %v391, 0.0
        %v450 = vmax.f32 %v396, 0.0
        %v451 = vmax.f32 %v401, 0.0
        %v452 = vmax.f32 %v406, 0.0
        %v453 = vmax.f32 %v411, 0.0
        %v454 = vmax.f32 %v416, 0.0
        %v455 = vmax.f32 %v421, 0.0
        %v456 = vmax.f32 %v426, 0.0
        %v457 = vmax.f32 %v431, 0.0
        %v458 = vmax.f32 %v436, 0.0
        %v459 = vmax.f32 %v441, 0.0
        %v460 = vld [vmem:[%s3] sm:$0xf]
        %v461 = vld [vmem:[%s4] sm:$0xf]
        %463 = vset.pattern.permute.xlu0 0
        %464 = vperm.xlu0 %463, %v461
        %v465 = vpop.permute.xlu0 %464
        %467 = vmatprep.subr.mxu0 0.0
        %468 = vmatpush1.xpose.msra.mxu0 %v444
        %469 = vmatprep.subr.mxu0 0.0
        %470 = vmatpush1.xpose.msra.mxu0 %v445
        %471 = vmatprep.subr.mxu0 0.0
        %472 = vmatpush1.xpose.msra.mxu0 %v446
        %473 = vmatprep.subr.mxu0 0.0
        %474 = vmatpush1.xpose.msra.mxu0 %v447
        %475 = vmatprep.subr.mxu0 0.0
        %476 = vmatpush1.xpose.msra.mxu0 %v448
        %477 = vmatprep.subr.mxu0 0.0
        %478 = vmatpush1.xpose.msra.mxu0 %v449
        %479 = vmatprep.subr.mxu0 0.0
        %480 = vmatpush1.xpose.msra.mxu0 %v450
        %481 = vmatprep.subr.mxu0 0.0
        %482 = vmatpush1.xpose.msra.mxu0 %v451
        %483 = vmatprep.subr.mxu0 0.0
        %484 = vmatpush1.xpose.msra.mxu0 %v452
        %485 = vmatprep.subr.mxu0 0.0
        %486 = vmatpush1.xpose.msra.mxu0 %v453
        %487 = vmatprep.subr.mxu0 0.0
        %488 = vmatpush1.xpose.msra.mxu0 %v454
        %489 = vmatprep.subr.mxu0 0.0
        %490 = vmatpush1.xpose.msra.mxu0 %v455
        %491 = vmatprep.subr.mxu0 0.0
        %492 = vmatpush1.xpose.msra.mxu0 %v456
        %493 = vmatprep.subr.mxu0 0.0
        %494 = vmatpush1.xpose.msra.mxu0 %v457
        %495 = vmatprep.subr.mxu0 0.0
        %496 = vmatpush1.xpose.msra.mxu0 %v458
        %497 = vmatprep.subr.mxu0 0.0
        %498 = vmatpush1.xpose.msra.mxu0 %v459
        %499 = vmatprep.subr.mxu0 0.0
        %500 = vmatpush1.xpose.msra.mxu0 0.0
        %501 = vmatprep.subr.mxu0 0.0
        %502 = vmatpush1.xpose.msra.mxu0 0.0
        %503 = vmatprep.subr.mxu0 0.0
        %504 = vmatpush1.xpose.msra.mxu0 0.0
        %505 = vmatprep.subr.mxu0 0.0
        %506 = vmatpush1.xpose.msra.mxu0 0.0
        %507 = vmatprep.subr.mxu0 0.0
        %508 = vmatpush1.xpose.msra.mxu0 0.0
        %509 = vmatprep.subr.mxu0 0.0
        %510 = vmatpush1.xpose.msra.mxu0 0.0
        %511 = vmatprep.subr.mxu0 0.0
        %512 = vmatpush1.xpose.msra.mxu0 0.0
        %513 = vmatprep.subr.mxu0 0.0
        %514 = vmatpush1.xpose.msra.mxu0 0.0
        %515 = vmatprep.subr.mxu0 0.0
        %516 = vmatpush1.xpose.msra.mxu0 0.0
        %517 = vmatprep.subr.mxu0 0.0
        %518 = vmatpush1.xpose.msra.mxu0 0.0
        %519 = vmatprep.subr.mxu0 0.0
        %520 = vmatpush1.xpose.msra.mxu0 0.0
        %521 = vmatprep.subr.mxu0 0.0
        %522 = vmatpush1.xpose.msra.mxu0 0.0
        %523 = vmatprep.subr.mxu0 0.0
        %524 = vmatpush1.xpose.msra.mxu0 0.0
        %525 = vmatprep.subr.mxu0 0.0
        %526 = vmatpush1.xpose.msra.mxu0 0.0
        %527 = vmatprep.subr.mxu0 0.0
        %528 = vmatpush1.xpose.msra.mxu0 0.0
        %529 = vmatprep.subr.mxu0 0.0
        %530 = vmatpush1.xpose.msra.mxu0 0.0
        %531 = vmatprep.mubr.f32.mxu0 0.0
        %532 = vmatmul.mubr.f32.gmra.mrb[0].mxu0 %v460
        %v533 = vpop.f32.mrb[0].mxu0
        %v534 = vadd.f32 %v465, %v533
        %v535 = vpop.f32.mrb[0].mxu0
        %536 = vdwg.mxu0
        %537 = vst [vmem:[%s218] sm:$0xf] %v534
        %s538 = sand.u32 %s137, 1
        %s539 = scalar_lea.sflag [#allocation3], %s538
        %s540 = sand.u32 %s137, 1
        %s541 = smul.addr %s540, 4
        %s542 = scalar_lea.vmem [#allocation2], %s541
        // Predicated region
        $region41: #{mlp_critic_forward.1} parent=39 // pred_check
          %p543 = pneg %p147
        $region42: #{mlp_critic_forward.1} parent=39 // pred_check_branch
          %545 = sbr.rel (%p543) target = $region44
        $region43: #{mlp_critic_forward.1} parent=39 // pred_region
          %s547 = ssub.s32 64, 64
          %548 = vsyncadd %s539, %s547
          %s549 = smul.addr %s19, 64
          %s550 = scalar_lea.hbm %s5, %s549
          %s552 = sshll.u32 %s542, 4
          %s553 = int_to_ptr.vmem [resolvable:$true] %s552
          %555 = dma.vmem_to_hbm [thread:$0]  %s553, 64, %s550, %s539
        $region44: #{mlp_critic_forward.1} parent=39 // pred_fallthru
          _
      $region40: #{mlp_critic_forward.1} parent=5 // pred_fallthru
        _
      %p556 = scmp.le.s32.totalorder 2, %s14
      // Predicated region
      $region45: #{mlp_critic_forward.1} parent=5 // pred_check
        %p557 = pneg %p556
      $region46: #{mlp_critic_forward.1} parent=5 // pred_check_branch
        %559 = sbr.rel (%p557) target = $region48
      $region47: #{mlp_critic_forward.1} parent=5 // pred_region
        %s560 = ssub.s32 %s14, 2
        // Predicated region
        $region49: #{mlp_critic_forward.1} parent=47 // pred_check
          %p561 = pneg %p153
        $region50: #{mlp_critic_forward.1} parent=47 // pred_check_branch
          %563 = sbr.rel (%p561) target = $region52
        $region51: #{mlp_critic_forward.1} parent=47 // pred_region
          %s564 = sand.u32 %s138, 1
          %s565 = scalar_lea.sflag [#allocation3], %s564
          %s566 = sand.u32 %s138, 1
          %s567 = smul.addr %s566, 4
          %s568 = scalar_lea.vmem [#allocation2], %s567
          %569 = dma.done %s565, 64
        $region52: #{mlp_critic_forward.1} parent=47 // pred_fallthru
          _
      $region48: #{mlp_critic_forward.1} parent=5 // pred_fallthru
        _
    $region6: #{mlp_critic_forward.1} parent=1 // loop_footer
      %s18 = sadd.s32 1, %s14
    $region7: #{mlp_critic_forward.1} parent=1 // loop_footer_branch
      %13 = sbr.rel target = $region3
    $region8: #{mlp_critic_forward.1} parent=1 // loop_exit
      _
    %570 = vsyncpa [#allocation3], 1
    %s571 = scalar_lea.sflag [#allocation3], 1
    %572 = vsyncpa %s571, 1

</llo_original>
